<compile_context>
chip_gen: v7x
topology: tpu7x:2x2x1
jax: 0.10.0
libtpu: 0.0.40
codegen_flags: <defaults>
</compile_context>

<pallas_src>
import jax
import jax.numpy as jnp
from jax.experimental import pallas as pl
from jax.experimental.pallas import tpu as pltpu


def discriminator_kernel(u_ref, ws_ref, w1u_ref, w1s_ref, w2_ref, c_ref, out_ref):
    f32 = jnp.float32
    bf16 = jnp.bfloat16

    u = u_ref[...].astype(bf16)                     # (tb, d_u) merged [x | a | s]
    N = w2_ref.shape[0]

    # s branch: relu(s @ Ws + bs).  Ws is zero-padded over the [x, a] rows so the
    # merged tile feeds the MXU directly.  c_ref row 0 = bs.
    s0 = jnp.dot(u, ws_ref[...], preferred_element_type=f32) + c_ref[0:1, :64]
    s0 = jnp.maximum(s0, 0.0)

    # lin1(concat([x, a, s0])) == u @ W1u_pad + s0 @ W1s   (cat folded away).
    h1 = jnp.dot(u, w1u_ref[...], preferred_element_type=f32)
    h1 = h1 + jnp.dot(s0.astype(bf16), w1s_ref[...], preferred_element_type=f32)
    h1 = jnp.maximum(h1 + c_ref[1:2, :N], 0.0)      # c_ref row 1 = b1

    # lin2 + relu.
    h2 = jnp.dot(h1.astype(bf16), w2_ref[...], preferred_element_type=f32)
    h2 = jnp.maximum(h2 + c_ref[2:3, :N], 0.0)      # c_ref row 2 = b2

    # lin3 (N -> 1): VPU multiply + XLU lane reduce (no 1-lane matmul).
    # c_ref row 3 = w3 row, c_ref[4, 0] = b3 scalar.
    y = jnp.sum(h2 * c_ref[3:4, :N], axis=-1, keepdims=True) + c_ref[4:5, 0:1]

    # Sigmoid: exp on the EUP, denominator reciprocal off the VPU divide path.
    sig = pl.reciprocal(1.0 + jnp.exp(-y), approx=False)        # (tb, 1) f32

    # Minimal 4 B/row writeback straight into the (B, 1) output block.
    out_ref[...] = sig.astype(out_ref.dtype)


def discriminator_forward(x, a, s, params, *, tb=None):
    """x: (B, x_dim), a: (B, a_dim), s: (B, S), all float32. Returns (B, 1)."""
    B = x.shape[0]
    u = jnp.concatenate([x, a, s], axis=1)          # single merged activation operand
    d_u = u.shape[1]
    N = params["w2"].shape[0]

    if tb is None:
        # Largest candidate tile that still leaves >= 2 grid steps, so
        # dimension_semantics=("parallel",) can shard work over v7x's 2 TCs.
        # Capped at 1024 to keep f32 intermediates inside v5e's vreg file;
        # sweep 256..2048 per generation if tuning further.
        tb = B
        for cand in (1024, 512, 256, 128, 64, 32, 16, 8):
            if B % cand == 0 and B // cand >= 2:
                tb = cand
                break
    assert B % tb == 0, "batch must be divisible by the batch tile"
    grid = (B // tb,)

    row_spec = lambda feat: pl.BlockSpec((tb, feat), lambda i: (i, 0))
    # Constant blocks: same index every step -> stay VMEM-resident across the grid.
    # (pipeline_mode=pl.Buffered(1) would also drop their double-buffering, but is
    #  skipped for lowering compatibility; these blocks total < 20 KB.)
    const_spec = lambda arr: pl.BlockSpec(arr.shape, lambda i: (0, 0))

    ws_pad, w1u_pad, w1s, w2, consts = (params["ws_pad"], params["w1u_pad"],
                                        params["w1s"], params["w2"],
                                        params["consts"])

    # Advisory cost hint: this call is tiny; keep XLA from over-serializing around it.
    flops = 2 * B * (d_u * 64 + d_u * N + 64 * N + N * N + N)
    w_bytes = sum(int(w.size) * w.dtype.itemsize
                  for w in (ws_pad, w1u_pad, w1s, w2, consts))
    bytes_accessed = int(u.size) * 4 + w_bytes + B * 4
    cost = pl.CostEstimate(flops=int(flops), transcendentals=int(B),
                           bytes_accessed=int(bytes_accessed))

    out = pl.pallas_call(
        discriminator_kernel,
        out_shape=jax.ShapeDtypeStruct((B, 1), jnp.float32),
        grid=grid,
        in_specs=[
            row_spec(d_u),              # merged activations, tiled over batch
            const_spec(ws_pad),         # (d_u, 64)  bf16, zero rows over [x, a]
            const_spec(w1u_pad),        # (d_u, N)   bf16, zero rows over s
            const_spec(w1s),            # (64, N)    bf16
            const_spec(w2),             # (N, N)     bf16
            const_spec(consts),         # (5, max(64,N)) f32: bs, b1, b2, w3, b3
        ],
        out_specs=pl.BlockSpec((tb, 1), lambda i: (i, 0)),
        compiler_params=pltpu.CompilerParams(
            dimension_semantics=("parallel",)),
        cost_estimate=cost,
    )(u, ws_pad, w1u_pad, w1s, w2, consts)

    return out


def init_params(key, *, S, N, x_dim, a_dim):
    """Torch-style Linear init. Weights stored (in, out) = W_torch.T, bf16 for MXU."""
    ks = jax.random.split(key, 8)

    def lin(kw, kb, fan_in, fan_out):
        bound = 1.0 / jnp.sqrt(jnp.float32(fan_in))
        w = jax.random.uniform(kw, (fan_in, fan_out), jnp.float32, -bound, bound)
        b = jax.random.uniform(kb, (1, fan_out), jnp.float32, -bound, bound)
        return w, b

    ws, bs = lin(ks[0], ks[1], S, 64)                       # s1
    z_dim = x_dim + a_dim + 64
    w1, b1 = lin(ks[2], ks[3], z_dim, N)                    # lin1
    w2, b2 = lin(ks[4], ks[5], N, N)                        # lin2
    w3, b3 = lin(ks[6], ks[7], N, 1)                        # lin3

    d_xa = x_dim + a_dim

    # Padded weights for the single merged input u = [x | a | s]:
    #   u @ ws_pad  == s  @ Ws        (zero rows over the xa part)
    #   u @ w1u_pad == xa @ W1[:d_xa] (zero rows over the s part)
    ws_pad = jnp.concatenate([jnp.zeros((d_xa, 64), jnp.float32), ws], axis=0)
    w1u_pad = jnp.concatenate([w1[:d_xa], jnp.zeros((S, N), jnp.float32)], axis=0)
    w1s = w1[d_xa:]                                         # rows for relu(s1(s))

    # Pack all f32 row constants into one VMEM slab: rows = [bs, b1, b2, w3^T, b3].
    C = max(64, N)
    pad_row = lambda r: jnp.pad(r, ((0, 0), (0, C - r.shape[1])))
    consts = jnp.concatenate(
        [pad_row(bs), pad_row(b1), pad_row(b2), pad_row(w3.T), pad_row(b3)], axis=0)

    return dict(
        ws_pad=ws_pad.astype(jnp.bfloat16),
        w1u_pad=w1u_pad.astype(jnp.bfloat16),
        w1s=w1s.astype(jnp.bfloat16),
        w2=w2.astype(jnp.bfloat16),
        consts=consts.astype(jnp.float32),
    )


def discriminator_reference(x, a, s, p):
    """Pure-JAX reference with the same bf16 weight/activation quantization."""
    f32 = jnp.float32

    def mm(act, w):
        return jnp.dot(act.astype(jnp.bfloat16), w, preferred_element_type=f32)

    u = jnp.concatenate([x, a, s], axis=1)
    N = p["w2"].shape[0]
    c = p["consts"]
    s0 = jax.nn.relu(mm(u, p["ws_pad"]) + c[0:1, :64])
    h1 = jax.nn.relu(mm(u, p["w1u_pad"]) + mm(s0, p["w1s"]) + c[1:2, :N])
    h2 = jax.nn.relu(mm(h1, p["w2"]) + c[2:3, :N])
    y = jnp.sum(h2 * c[3:4, :N], axis=-1, keepdims=True) + c[4, 0]
    return jax.nn.sigmoid(y)


if __name__ == "__main__":
    key = jax.random.PRNGKey(0)
    kx, ka, ks_, kp = jax.random.split(key, 4)

    B, S, N = 256, 16, 32
    x_dim, a_dim = 8, 8                 # z_dim = x_dim + a_dim + 64 = 80

    x = jax.random.normal(kx, (B, x_dim), jnp.float32)
    a = jax.random.normal(ka, (B, a_dim), jnp.float32)
    s = jax.random.normal(ks_, (B, S), jnp.float32)
    params = init_params(kp, S=S, N=N, x_dim=x_dim, a_dim=a_dim)

    out = discriminator_forward(x, a, s, params)    # tb auto: 128 -> 2 grid steps
    jax.block_until_ready(out)

    ref = discriminator_reference(x, a, s, params)
    assert out.shape == (B, 1), f"bad output shape {out.shape}"
    max_err = float(jnp.max(jnp.abs(out - ref)))
    assert max_err < 1e-3, f"mismatch vs reference, max err {max_err}"

    print("KERNEL_OK")
</pallas_src>

<mosaic_0001>
module attributes {stable_mosaic.version = 11 : i64} {
  func.func @discriminator_kernel(%arg0: i32, %arg1: memref<128x32xf32, #tpu.memory_space<vmem>>, %arg2: memref<32x64xbf16, #tpu.memory_space<vmem>>, %arg3: memref<32x32xbf16, #tpu.memory_space<vmem>>, %arg4: memref<64x32xbf16, #tpu.memory_space<vmem>>, %arg5: memref<32x32xbf16, #tpu.memory_space<vmem>>, %arg6: memref<5x64xf32, #tpu.memory_space<vmem>>, %arg7: memref<128x1xf32, #tpu.memory_space<vmem>>) attributes {dimension_semantics = [#tpu.dimension_semantics<parallel>], iteration_bounds = array<i64: 2>, scalar_prefetch = 0 : i64, scratch_operands = 0 : i64, tpu.core_type = #tpu.core_type<tc>, window_params = [{transform_indices = @transform_0, window_bounds = array<i64: 128, 32>}, {pipeline_mode = #tpu.pipeline_mode<synchronous>, transform_indices = @transform_1, window_bounds = array<i64: 32, 64>}, {pipeline_mode = #tpu.pipeline_mode<synchronous>, transform_indices = @transform_2, window_bounds = array<i64: 32, 32>}, {pipeline_mode = #tpu.pipeline_mode<synchronous>, transform_indices = @transform_3, window_bounds = array<i64: 64, 32>}, {pipeline_mode = #tpu.pipeline_mode<synchronous>, transform_indices = @transform_4, window_bounds = array<i64: 32, 32>}, {pipeline_mode = #tpu.pipeline_mode<synchronous>, transform_indices = @transform_5, window_bounds = array<i64: 5, 64>}, {transform_indices = @transform_6, window_bounds = array<i64: 128, 1>}]} {
    %c0 = arith.constant 0 : index
    %c0_0 = arith.constant 0 : index
    %0 = vector.load %arg1[%c0, %c0_0] : memref<128x32xf32, #tpu.memory_space<vmem>>, vector<128x32xf32>
    %1 = arith.truncf %0 : vector<128x32xf32> to vector<128x32xbf16>
    %c0_1 = arith.constant 0 : index
    %c0_2 = arith.constant 0 : index
    %2 = vector.load %arg2[%c0_1, %c0_2] : memref<32x64xbf16, #tpu.memory_space<vmem>>, vector<32x64xbf16>
    %cst = arith.constant dense<0.000000e+00> : vector<128x64xf32>
    %3 = tpu.matmul %1, %2, %cst {dimension_numbers = #tpu.dot_dimension_numbers<[1], [0], [0], [1], [0, 0, 1, 1], [], []>} : vector<128x32xbf16>, vector<32x64xbf16>, vector<128x64xf32> -> vector<128x64xf32>
    %c0_3 = arith.constant 0 : index
    %c0_4 = arith.constant 0 : index
    %4 = vector.load %arg6[%c0_3, %c0_4] : memref<5x64xf32, #tpu.memory_space<vmem>>, vector<1x64xf32>
    %5 = vector.broadcast %4 : vector<1x64xf32> to vector<128x64xf32>
    %6 = arith.addf %3, %5 : vector<128x64xf32>
    %cst_5 = arith.constant 0.000000e+00 : f32
    %7 = vector.broadcast %cst_5 : f32 to vector<128x64xf32>
    %8 = arith.maximumf %6, %7 : vector<128x64xf32>
    %c0_6 = arith.constant 0 : index
    %c0_7 = arith.constant 0 : index
    %9 = vector.load %arg3[%c0_6, %c0_7] : memref<32x32xbf16, #tpu.memory_space<vmem>>, vector<32x32xbf16>
    %cst_8 = arith.constant dense<0.000000e+00> : vector<128x32xf32>
    %10 = tpu.matmul %1, %9, %cst_8 {dimension_numbers = #tpu.dot_dimension_numbers<[1], [0], [0], [1], [0, 0, 1, 1], [], []>} : vector<128x32xbf16>, vector<32x32xbf16>, vector<128x32xf32> -> vector<128x32xf32>
    %11 = arith.truncf %8 : vector<128x64xf32> to vector<128x64xbf16>
    %c0_9 = arith.constant 0 : index
    %c0_10 = arith.constant 0 : index
    %12 = vector.load %arg4[%c0_9, %c0_10] : memref<64x32xbf16, #tpu.memory_space<vmem>>, vector<64x32xbf16>
    %cst_11 = arith.constant dense<0.000000e+00> : vector<128x32xf32>
    %13 = tpu.matmul %11, %12, %cst_11 {dimension_numbers = #tpu.dot_dimension_numbers<[1], [0], [0], [1], [0, 0, 1, 1], [], []>} : vector<128x64xbf16>, vector<64x32xbf16>, vector<128x32xf32> -> vector<128x32xf32>
    %14 = arith.addf %10, %13 : vector<128x32xf32>
    %c1 = arith.constant 1 : index
    %c0_12 = arith.constant 0 : index
    %15 = vector.load %arg6[%c1, %c0_12] : memref<5x64xf32, #tpu.memory_space<vmem>>, vector<1x32xf32>
    %16 = vector.broadcast %15 : vector<1x32xf32> to vector<128x32xf32>
    %17 = arith.addf %14, %16 : vector<128x32xf32>
    %cst_13 = arith.constant 0.000000e+00 : f32
    %18 = vector.broadcast %cst_13 : f32 to vector<128x32xf32>
    %19 = arith.maximumf %17, %18 : vector<128x32xf32>
    %20 = arith.truncf %19 : vector<128x32xf32> to vector<128x32xbf16>
    %c0_14 = arith.constant 0 : index
    %c0_15 = arith.constant 0 : index
    %21 = vector.load %arg5[%c0_14, %c0_15] : memref<32x32xbf16, #tpu.memory_space<vmem>>, vector<32x32xbf16>
    %cst_16 = arith.constant dense<0.000000e+00> : vector<128x32xf32>
    %22 = tpu.matmul %20, %21, %cst_16 {dimension_numbers = #tpu.dot_dimension_numbers<[1], [0], [0], [1], [0, 0, 1, 1], [], []>} : vector<128x32xbf16>, vector<32x32xbf16>, vector<128x32xf32> -> vector<128x32xf32>
    %c2 = arith.constant 2 : index
    %c0_17 = arith.constant 0 : index
    %23 = vector.load %arg6[%c2, %c0_17] : memref<5x64xf32, #tpu.memory_space<vmem>>, vector<1x32xf32>
    %24 = vector.broadcast %23 : vector<1x32xf32> to vector<128x32xf32>
    %25 = arith.addf %22, %24 : vector<128x32xf32>
    %cst_18 = arith.constant 0.000000e+00 : f32
    %26 = vector.broadcast %cst_18 : f32 to vector<128x32xf32>
    %27 = arith.maximumf %25, %26 : vector<128x32xf32>
    %c3 = arith.constant 3 : index
    %c0_19 = arith.constant 0 : index
    %28 = vector.load %arg6[%c3, %c0_19] : memref<5x64xf32, #tpu.memory_space<vmem>>, vector<1x32xf32>
    %29 = vector.broadcast %28 : vector<1x32xf32> to vector<128x32xf32>
    %30 = arith.mulf %27, %29 : vector<128x32xf32>
    %cst_20 = arith.constant dense<0.000000e+00> : vector<128xf32>
    %31 = vector.multi_reduction <add>, %30, %cst_20 [1] : vector<128x32xf32> to vector<128xf32>
    %32 = vector.shape_cast %31 : vector<128xf32> to vector<128x1xf32>
    %c4 = arith.constant 4 : index
    %c0_21 = arith.constant 0 : index
    %33 = vector.load %arg6[%c4, %c0_21] : memref<5x64xf32, #tpu.memory_space<vmem>>, vector<1x1xf32>
    %34 = vector.broadcast %33 : vector<1x1xf32> to vector<128x1xf32>
    %35 = arith.addf %32, %34 : vector<128x1xf32>
    %cst_22 = arith.constant 0.000000e+00 : f32
    %36 = vector.broadcast %cst_22 : f32 to vector<128x1xf32>
    %37 = arith.subf %36, %35 : vector<128x1xf32>
    %38 = math.exp %37 : vector<128x1xf32>
    %cst_23 = arith.constant 1.000000e+00 : f32
    %39 = vector.broadcast %cst_23 : f32 to vector<128x1xf32>
    %40 = arith.addf %39, %38 : vector<128x1xf32>
    %41 = tpu.reciprocal %40 : vector<128x1xf32> -> vector<128x1xf32>
    %c0_24 = arith.constant 0 : index
    %c0_25 = arith.constant 0 : index
    %42 = vector.load %arg7[%c0_24, %c0_25] : memref<128x1xf32, #tpu.memory_space<vmem>>, vector<128x1xf32>
    tpu.vector_store %arg7[%c0_24, %c0_25], %41 {strides = array<i32>} : memref<128x1xf32, #tpu.memory_space<vmem>>, vector<128x1xf32>,
    return
  }
  func.func @transform_0(%arg0: i32) -> (i32, i32) {
    %c0_i32 = arith.constant 0 : i32
    %c0_i32_0 = arith.constant 0 : i32
    return %arg0, %c0_i32 : i32, i32
  }
  func.func @transform_1(%arg0: i32) -> (i32, i32) {
    %c0_i32 = arith.constant 0 : i32
    %c0_i32_0 = arith.constant 0 : i32
    %c0_i32_1 = arith.constant 0 : i32
    return %c0_i32, %c0_i32_0 : i32, i32
  }
  func.func @transform_2(%arg0: i32) -> (i32, i32) {
    %c0_i32 = arith.constant 0 : i32
    %c0_i32_0 = arith.constant 0 : i32
    %c0_i32_1 = arith.constant 0 : i32
    return %c0_i32, %c0_i32_0 : i32, i32
  }
  func.func @transform_3(%arg0: i32) -> (i32, i32) {
    %c0_i32 = arith.constant 0 : i32
    %c0_i32_0 = arith.constant 0 : i32
    %c0_i32_1 = arith.constant 0 : i32
    return %c0_i32, %c0_i32_0 : i32, i32
  }
  func.func @transform_4(%arg0: i32) -> (i32, i32) {
    %c0_i32 = arith.constant 0 : i32
    %c0_i32_0 = arith.constant 0 : i32
    %c0_i32_1 = arith.constant 0 : i32
    return %c0_i32, %c0_i32_0 : i32, i32
  }
  func.func @transform_5(%arg0: i32) -> (i32, i32) {
    %c0_i32 = arith.constant 0 : i32
    %c0_i32_0 = arith.constant 0 : i32
    %c0_i32_1 = arith.constant 0 : i32
    return %c0_i32, %c0_i32_0 : i32, i32
  }
  func.func @transform_6(%arg0: i32) -> (i32, i32) {
    %c0_i32 = arith.constant 0 : i32
    %c0_i32_0 = arith.constant 0 : i32
    return %arg0, %c0_i32 : i32, i32
  }
}

</mosaic_0001>

<llo_original>
// kernel: tpu_custom_call.1
$region0: #{tpu_custom_call.1}
  #allocation0 [shape = 'u32[]', space=smem, size = 0x4, offset = 0x4, fixed_abs, tag = 'smem constant byte address 0x4 - core index']
  #allocation1 [shape = 'u32[144,128]{1,0:T(1,128)}', space=vmem, size = 0x12000, scoped, tag = 'internal scratch']
  %s0 = inlined_call_operand.vmem [shape: f32[256,32], index: 0, kind: input, shape index: {}]
  %s1 = inlined_call_operand.vmem [shape: bf16[32,64], index: 1, kind: input, shape index: {}]
  %s2 = inlined_call_operand.vmem [shape: bf16[32,32], index: 2, kind: input, shape index: {}]
  %s3 = inlined_call_operand.vmem [shape: bf16[64,32], index: 3, kind: input, shape index: {}]
  %s4 = inlined_call_operand.vmem [shape: bf16[32,32], index: 4, kind: input, shape index: {}]
  %s5 = inlined_call_operand.vmem [shape: f32[5,64], index: 5, kind: input, shape index: {}]
  %s6 = inlined_call_operand.vmem [shape: f32[256,1], index: 6, kind: output, shape index: {}]
  %s7 = sld [smem:[#allocation0]]
  $region57: #{tpu_custom_call.1} parent=0
    _
  %s9 = ssub.s32 1, %s7
  %s10 = scalar_select 0, %s9, %s7
  loop: start=0, step=1, limit=4
  $region2: #{tpu_custom_call.1} parent=0 // loop_pre_header
    _
  $region3: #{tpu_custom_call.1} parent=0 // loop_header
    %s12 = sphi 0, %s16
    %p13 = scmp.ge.s32.totalorder %s12, 4
    %s22 = sphi 0, %s24
    %s25 = sphi 0, %s22
    %s26 = sphi 0, %s25
    %s42 = sphi 0, %s26
    %s46 = sphi 0, %s46
    %s48 = sphi 0, %s46
    %s49 = sphi 0, %s48
    %s63 = sphi 0, %s49
    %s67 = sphi 0, %s67
    %s69 = sphi 0, %s67
    %s70 = sphi 0, %s69
    %s84 = sphi 0, %s70
    %s88 = sphi 0, %s88
    %s90 = sphi 0, %s88
    %s91 = sphi 0, %s90
    %s105 = sphi 0, %s91
    %s109 = sphi 0, %s109
    %s111 = sphi 0, %s109
    %s112 = sphi 0, %s111
    %s126 = sphi 0, %s112
    %s130 = sphi 0, %s130
    %s132 = sphi 0, %s130
    %s133 = sphi 0, %s132
    %s147 = sphi 0, %s133
    %s153 = sphi 0, %s155
    %s156 = sphi 0, %s153
    %s157 = sphi 0, %s156
    %s173 = sphi 0, %s157
  $region4: #{tpu_custom_call.1} parent=0 // loop_header_branch
    %15 = sbr.rel (%p13) target = $region8
  $region5: #{tpu_custom_call.1} parent=0 // loop_body
    %s17 = ssub.s32 %s12, 1
    %s18 = ssub.s32 %s12, 2
    %s19 = sadd.s32 %s12, 1
    %s20 = ssub.s32 %s12, %s19
    %p21 = scmp.eq.s32.totalorder %s20, 0
    %s23 = sadd.s32 %s22, 1
    %s24 = scalar_select %p21, %s22, %s23
    %p27 = pneg %p21
    %p28 = scmp.eq.s32.totalorder %s12, 1
    %p29 = por %p27, %p28
    %p30 = scmp.ne.s32.totalorder %s22, %s25
    %p31 = scmp.eq.s32.totalorder %s12, 0
    %p32 = por %p30, %p31
    %p33 = scmp.ne.s32.totalorder %s22, %s25
    %p34 = scmp.eq.s32.totalorder %s17, 1
    %p35 = por %p33, %p34
    %p36 = scmp.ne.s32.totalorder %s25, %s26
    %p37 = scmp.eq.s32.totalorder %s17, 0
    %p38 = por %p36, %p37
    %p39 = scmp.ne.s32.totalorder %s25, %s26
    %p40 = scmp.eq.s32.totalorder %s18, 1
    %p41 = por %p39, %p40
    %p43 = scmp.ne.s32.totalorder %s26, %s42
    %p44 = scmp.eq.s32.totalorder %s18, 0
    %p45 = por %p43, %p44
    %s47 = sadd.s32 %s46, 1
    %p50 = scmp.eq.s32.totalorder %s12, 1
    %p51 = scmp.ne.s32.totalorder %s46, %s48
    %p52 = scmp.eq.s32.totalorder %s12, 0
    %p53 = por %p51, %p52
    %p54 = scmp.ne.s32.totalorder %s46, %s48
    %p55 = scmp.eq.s32.totalorder %s17, 1
    %p56 = por %p54, %p55
    %p57 = scmp.ne.s32.totalorder %s48, %s49
    %p58 = scmp.eq.s32.totalorder %s17, 0
    %p59 = por %p57, %p58
    %p60 = scmp.ne.s32.totalorder %s48, %s49
    %p61 = scmp.eq.s32.totalorder %s18, 1
    %p62 = por %p60, %p61
    %p64 = scmp.ne.s32.totalorder %s49, %s63
    %p65 = scmp.eq.s32.totalorder %s18, 0
    %p66 = por %p64, %p65
    %s68 = sadd.s32 %s67, 1
    %p71 = scmp.eq.s32.totalorder %s12, 1
    %p72 = scmp.ne.s32.totalorder %s67, %s69
    %p73 = scmp.eq.s32.totalorder %s12, 0
    %p74 = por %p72, %p73
    %p75 = scmp.ne.s32.totalorder %s67, %s69
    %p76 = scmp.eq.s32.totalorder %s17, 1
    %p77 = por %p75, %p76
    %p78 = scmp.ne.s32.totalorder %s69, %s70
    %p79 = scmp.eq.s32.totalorder %s17, 0
    %p80 = por %p78, %p79
    %p81 = scmp.ne.s32.totalorder %s69, %s70
    %p82 = scmp.eq.s32.totalorder %s18, 1
    %p83 = por %p81, %p82
    %p85 = scmp.ne.s32.totalorder %s70, %s84
    %p86 = scmp.eq.s32.totalorder %s18, 0
    %p87 = por %p85, %p86
    %s89 = sadd.s32 %s88, 1
    %p92 = scmp.eq.s32.totalorder %s12, 1
    %p93 = scmp.ne.s32.totalorder %s88, %s90
    %p94 = scmp.eq.s32.totalorder %s12, 0
    %p95 = por %p93, %p94
    %p96 = scmp.ne.s32.totalorder %s88, %s90
    %p97 = scmp.eq.s32.totalorder %s17, 1
    %p98 = por %p96, %p97
    %p99 = scmp.ne.s32.totalorder %s90, %s91
    %p100 = scmp.eq.s32.totalorder %s17, 0
    %p101 = por %p99, %p100
    %p102 = scmp.ne.s32.totalorder %s90, %s91
    %p103 = scmp.eq.s32.totalorder %s18, 1
    %p104 = por %p102, %p103
    %p106 = scmp.ne.s32.totalorder %s91, %s105
    %p107 = scmp.eq.s32.totalorder %s18, 0
    %p108 = por %p106, %p107
    %s110 = sadd.s32 %s109, 1
    %p113 = scmp.eq.s32.totalorder %s12, 1
    %p114 = scmp.ne.s32.totalorder %s109, %s111
    %p115 = scmp.eq.s32.totalorder %s12, 0
    %p116 = por %p114, %p115
    %p117 = scmp.ne.s32.totalorder %s109, %s111
    %p118 = scmp.eq.s32.totalorder %s17, 1
    %p119 = por %p117, %p118
    %p120 = scmp.ne.s32.totalorder %s111, %s112
    %p121 = scmp.eq.s32.totalorder %s17, 0
    %p122 = por %p120, %p121
    %p123 = scmp.ne.s32.totalorder %s111, %s112
    %p124 = scmp.eq.s32.totalorder %s18, 1
    %p125 = por %p123, %p124
    %p127 = scmp.ne.s32.totalorder %s112, %s126
    %p128 = scmp.eq.s32.totalorder %s18, 0
    %p129 = por %p127, %p128
    %s131 = sadd.s32 %s130, 1
    %p134 = scmp.eq.s32.totalorder %s12, 1
    %p135 = scmp.ne.s32.totalorder %s130, %s132
    %p136 = scmp.eq.s32.totalorder %s12, 0
    %p137 = por %p135, %p136
    %p138 = scmp.ne.s32.totalorder %s130, %s132
    %p139 = scmp.eq.s32.totalorder %s17, 1
    %p140 = por %p138, %p139
    %p141 = scmp.ne.s32.totalorder %s132, %s133
    %p142 = scmp.eq.s32.totalorder %s17, 0
    %p143 = por %p141, %p142
    %p144 = scmp.ne.s32.totalorder %s132, %s133
    %p145 = scmp.eq.s32.totalorder %s18, 1
    %p146 = por %p144, %p145
    %p148 = scmp.ne.s32.totalorder %s133, %s147
    %p149 = scmp.eq.s32.totalorder %s18, 0
    %p150 = por %p148, %p149
    %s151 = ssub.s32 %s12, %s19
    %p152 = scmp.eq.s32.totalorder %s151, 0
    %s154 = sadd.s32 %s153, 1
    %s155 = scalar_select %p152, %s153, %s154
    %p158 = pneg %p152
    %p159 = scmp.eq.s32.totalorder %s12, 1
    %p160 = por %p158, %p159
    %p161 = scmp.ne.s32.totalorder %s153, %s156
    %p162 = scmp.eq.s32.totalorder %s12, 0
    %p163 = por %p161, %p162
    %p164 = scmp.ne.s32.totalorder %s153, %s156
    %p165 = scmp.eq.s32.totalorder %s17, 1
    %p166 = por %p164, %p165
    %p167 = scmp.ne.s32.totalorder %s156, %s157
    %p168 = scmp.eq.s32.totalorder %s17, 0
    %p169 = por %p167, %p168
    %p170 = scmp.ne.s32.totalorder %s156, %s157
    %p171 = scmp.eq.s32.totalorder %s18, 1
    %p172 = por %p170, %p171
    %p174 = scmp.ne.s32.totalorder %s157, %s173
    %p175 = scmp.eq.s32.totalorder %s18, 0
    %p176 = por %p174, %p175
    %p177 = scmp.le.s32.totalorder 1, %s12
    %p178 = scmp.lt.s32.totalorder %s12, 3
    %p179 = pnand %p177, %p178
    %p180 = pneg %p179
    // Predicated region
    $region9: #{tpu_custom_call.1} parent=5 // pred_check
      _
    $region10: #{tpu_custom_call.1} parent=5 // pred_check_branch
      %182 = sbr.rel (%p179) target = $region12
    $region11: #{tpu_custom_call.1} parent=5 // pred_region
      %s183 = ssub.s32 %s12, 1
      // Predicated region
      $region13: #{tpu_custom_call.1} parent=11 // pred_check
        %p184 = pneg %p59
      $region14: #{tpu_custom_call.1} parent=11 // pred_check_branch
        %186 = sbr.rel (%p184) target = $region16
      $region15: #{tpu_custom_call.1} parent=11 // pred_region
        _
      $region16: #{tpu_custom_call.1} parent=11 // pred_fallthru
        _
      // Predicated region
      $region17: #{tpu_custom_call.1} parent=11 // pred_check
        %p187 = pneg %p80
      $region18: #{tpu_custom_call.1} parent=11 // pred_check_branch
        %189 = sbr.rel (%p187) target = $region20
      $region19: #{tpu_custom_call.1} parent=11 // pred_region
        _
      $region20: #{tpu_custom_call.1} parent=11 // pred_fallthru
        _
      // Predicated region
      $region21: #{tpu_custom_call.1} parent=11 // pred_check
        %p190 = pneg %p101
      $region22: #{tpu_custom_call.1} parent=11 // pred_check_branch
        %192 = sbr.rel (%p190) target = $region24
      $region23: #{tpu_custom_call.1} parent=11 // pred_region
        _
      $region24: #{tpu_custom_call.1} parent=11 // pred_fallthru
        _
      // Predicated region
      $region25: #{tpu_custom_call.1} parent=11 // pred_check
        %p193 = pneg %p122
      $region26: #{tpu_custom_call.1} parent=11 // pred_check_branch
        %195 = sbr.rel (%p193) target = $region28
      $region27: #{tpu_custom_call.1} parent=11 // pred_region
        _
      $region28: #{tpu_custom_call.1} parent=11 // pred_fallthru
        _
      // Predicated region
      $region29: #{tpu_custom_call.1} parent=11 // pred_check
        %p196 = pneg %p143
      $region30: #{tpu_custom_call.1} parent=11 // pred_check_branch
        %198 = sbr.rel (%p196) target = $region32
      $region31: #{tpu_custom_call.1} parent=11 // pred_region
        _
      $region32: #{tpu_custom_call.1} parent=11 // pred_fallthru
        _
    $region12: #{tpu_custom_call.1} parent=5 // pred_fallthru
      _
    %p199 = scmp.lt.s32.totalorder %s12, 2
    // Predicated region
    $region33: #{tpu_custom_call.1} parent=5 // pred_check
      %p200 = pneg %p199
    $region34: #{tpu_custom_call.1} parent=5 // pred_check_branch
      %202 = sbr.rel (%p200) target = $region36
    $region35: #{tpu_custom_call.1} parent=5 // pred_region
      // Predicated region
      $region37: #{tpu_custom_call.1} parent=35 // pred_check
        %p203 = pneg %p32
      $region38: #{tpu_custom_call.1} parent=35 // pred_check_branch
        %205 = sbr.rel (%p203) target = $region40
      $region39: #{tpu_custom_call.1} parent=35 // pred_region
        %s206 = smul.u32 16, %s12
        %p207 = scmp.lt.s32.totalorder %s206, 31
        %s208 = scalar_select %p207, %s206, 31
        %s209 = smul.addr %s208, 8
        %s210 = scalar_lea.vmem %s0, %s209
        %s211 = smul.u32 16, %s12
      $region40: #{tpu_custom_call.1} parent=35 // pred_fallthru
        _
    $region36: #{tpu_custom_call.1} parent=5 // pred_fallthru
      _
    %p212 = scmp.le.s32.totalorder 1, %s12
    %p213 = scmp.lt.s32.totalorder %s12, 3
    %p214 = pnand %p212, %p213
    %p215 = pneg %p214
    // Predicated region
    $region41: #{tpu_custom_call.1} parent=5 // pred_check
      _
    $region42: #{tpu_custom_call.1} parent=5 // pred_check_branch
      %217 = sbr.rel (%p214) target = $region44
    $region43: #{tpu_custom_call.1} parent=5 // pred_region
      %s218 = ssub.s32 %s12, 1
      %s219 = smul.u32 16, %s17
      %p220 = scmp.lt.s32.totalorder %s219, 31
      %s221 = scalar_select %p220, %s219, 31
      %s222 = smul.addr %s221, 8
      %s223 = scalar_lea.vmem %s0, %s222
      %p224 = pneg %p38
      %p225 = pneg %p35
      %p226 = pneg %p59
      %p227 = pneg %p56
      %p228 = pneg %p80
      %p229 = pneg %p77
      %p230 = pneg %p101
      %p231 = pneg %p98
      %p232 = pneg %p122
      %p233 = pneg %p119
      %p234 = pneg %p143
      %p235 = pneg %p140
      %p236 = pneg %p169
      %p237 = pneg %p166
      %s238 = smul.u32 16, %s17
      %p239 = scmp.lt.s32.totalorder %s238, 31
      %s240 = scalar_select %p239, %s238, 31
      %s241 = smul.addr %s240, 8
      %s242 = scalar_lea.vmem %s6, %s241
      %s243 = smul.u32 16, %s17
      %p244 = scmp.lt.s32.totalorder %s243, 31
      %s245 = scalar_select %p244, %s243, 31
      %s246 = smul.addr %s245, 8
      %s247 = scalar_lea.vmem %s0, %s246
      %s248 = smul.u32 16, %s17
      %s249 = smul.u32 16, %s17
      %p250 = scmp.lt.s32.totalorder %s249, 31
      %s251 = scalar_select %p250, %s249, 31
      %s252 = smul.addr %s251, 8
      %s253 = scalar_lea.vmem %s6, %s252
      %s254 = smul.u32 16, %s17
      %v256 = vld [vmem:[%s247] sm:$0xff]
      %v257 = vld [vmem:[%s247 + $0x8] sm:$0xff]
      %v258 = vld [vmem:[%s247 + $0x10] sm:$0xff]
      %v259 = vld [vmem:[%s247 + $0x18] sm:$0xff]
      %v260 = vld [vmem:[%s247 + $0x20] sm:$0xff]
      %v261 = vld [vmem:[%s247 + $0x28] sm:$0xff]
      %v262 = vld [vmem:[%s247 + $0x30] sm:$0xff]
      %v263 = vld [vmem:[%s247 + $0x38] sm:$0xff]
      %v264 = vld [vmem:[%s247 + $0x40] sm:$0xff]
      %v265 = vld [vmem:[%s247 + $0x48] sm:$0xff]
      %v266 = vld [vmem:[%s247 + $0x50] sm:$0xff]
      %v267 = vld [vmem:[%s247 + $0x58] sm:$0xff]
      %v268 = vld [vmem:[%s247 + $0x60] sm:$0xff]
      %v269 = vld [vmem:[%s247 + $0x68] sm:$0xff]
      %v270 = vld [vmem:[%s247 + $0x70] sm:$0xff]
      %v271 = vld [vmem:[%s247 + $0x78] sm:$0xff]
      %v272 = vpack.c.bf16 %v257, %v256
      %v273 = vpack.c.bf16 %v259, %v258
      %v274 = vpack.c.bf16 %v261, %v260
      %v275 = vpack.c.bf16 %v263, %v262
      %v276 = vpack.c.bf16 %v265, %v264
      %v277 = vpack.c.bf16 %v267, %v266
      %v278 = vpack.c.bf16 %v269, %v268
      %v279 = vpack.c.bf16 %v271, %v270
      %v280 = vld [vmem:[%s1] sm:$0xf]
      %v281 = vld [vmem:[%s1 + $0x4] sm:$0xf]
      %v282 = vld [vmem:[%s1 + $0x8] sm:$0xf]
      %v283 = vld [vmem:[%s1 + $0xc] sm:$0xf]
      %v284 = vld [vmem:[%s5] sm:$0x1]
      %v285 = vlaneseq
      %v286 = vshrl.u32 %v285, 7
      %v287 = vsub.s32 0, %v286
      %v288 = vrot.slane %v284, %v287
      %v293 = vunpack.c.l.b16 %v280
      %v294 = vunpack.c.l.b16 %v281
      %v295 = vunpack.c.l.b16 %v282
      %v296 = vunpack.c.l.b16 %v283
      %v297 = vpack.c.b16 %v294, %v293
      %v298 = vpack.c.b16 %v296, %v295
      %vm301 = vcmask 261120
      %v303 = vsel %vm301, %v272, 0
      %v306 = vsel %vm301, %v273, 0
      %v309 = vsel %vm301, %v274, 0
      %v312 = vsel %vm301, %v275, 0
      %v315 = vsel %vm301, %v276, 0
      %v318 = vsel %vm301, %v277, 0
      %v321 = vsel %vm301, %v278, 0
      %v324 = vsel %vm301, %v279, 0
      %326 = vmatprep.subr.bf16.mxu0 0
      %327 = vmatpush1.bf16.msra.mxu0 %v297
      %328 = vmatprep.subr.bf16.mxu0 0
      %329 = vmatpush1.bf16.msra.mxu0 %v298
      %330 = vmatprep.subr.bf16.mxu0 0
      %331 = vmatpush1.bf16.msra.mxu0 0
      %332 = vmatprep.subr.bf16.mxu0 0
      %333 = vmatpush1.bf16.msra.mxu0 0
      %334 = vmatprep.subr.bf16.mxu0 0
      %335 = vmatpush1.bf16.msra.mxu0 0
      %336 = vmatprep.subr.bf16.mxu0 0
      %337 = vmatpush1.bf16.msra.mxu0 0
      %338 = vmatprep.subr.bf16.mxu0 0
      %339 = vmatpush1.bf16.msra.mxu0 0
      %340 = vmatprep.subr.bf16.mxu0 0
      %341 = vmatpush1.bf16.msra.mxu0 0
      %342 = vmatprep.subr.bf16.mxu0 0
      %343 = vmatpush1.bf16.msra.mxu0 0
      %344 = vmatprep.subr.bf16.mxu0 0
      %345 = vmatpush1.bf16.msra.mxu0 0
      %346 = vmatprep.subr.bf16.mxu0 0
      %347 = vmatpush1.bf16.msra.mxu0 0
      %348 = vmatprep.subr.bf16.mxu0 0
      %349 = vmatpush1.bf16.msra.mxu0 0
      %350 = vmatprep.subr.bf16.mxu0 0
      %351 = vmatpush1.bf16.msra.mxu0 0
      %352 = vmatprep.subr.bf16.mxu0 0
      %353 = vmatpush1.bf16.msra.mxu0 0
      %354 = vmatprep.subr.bf16.mxu0 0
      %355 = vmatpush1.bf16.msra.mxu0 0
      %356 = vmatprep.subr.bf16.mxu0 0
      %357 = vmatpush1.bf16.msra.mxu0 0
      %358 = vmatprep.mubr.bf16.mxu0 0
      %359 = vmatmul.mubr.bf16.gmra.mrb[0].mxu0 %v303
      %v360 = vpop.f32.mrb[0].mxu0
      %v361 = vadd.f32 %v288, %v360
      %v362 = vpop.f32.mrb[0].mxu0
      %v363 = vpop.f32.mrb[0].mxu0
      %v364 = vadd.f32 %v288, %v363
      %v365 = vpop.f32.mrb[0].mxu0
      %366 = vmatprep.mubr.bf16.mxu0 0
      %367 = vmatmul.mubr.bf16.gmra.mrb[0].mxu0 %v306
      %v368 = vpop.f32.mrb[0].mxu0
      %v369 = vadd.f32 %v288, %v368
      %v370 = vpop.f32.mrb[0].mxu0
      %v371 = vpop.f32.mrb[0].mxu0
      %v372 = vadd.f32 %v288, %v371
      %v373 = vpop.f32.mrb[0].mxu0
      %374 = vmatprep.mubr.bf16.mxu0 0
      %375 = vmatmul.mubr.bf16.gmra.mrb[0].mxu0 %v309
      %v376 = vpop.f32.mrb[0].mxu0
      %v377 = vadd.f32 %v288, %v376
      %v378 = vpop.f32.mrb[0].mxu0
      %v379 = vpop.f32.mrb[0].mxu0
      %v380 = vadd.f32 %v288, %v379
      %v381 = vpop.f32.mrb[0].mxu0
      %382 = vmatprep.mubr.bf16.mxu0 0
      %383 = vmatmul.mubr.bf16.gmra.mrb[0].mxu0 %v312
      %v384 = vpop.f32.mrb[0].mxu0
      %v385 = vadd.f32 %v288, %v384
      %v386 = vpop.f32.mrb[0].mxu0
      %v387 = vpop.f32.mrb[0].mxu0
      %v388 = vadd.f32 %v288, %v387
      %v389 = vpop.f32.mrb[0].mxu0
      %390 = vmatprep.mubr.bf16.mxu0 0
      %391 = vmatmul.mubr.bf16.gmra.mrb[0].mxu0 %v315
      %v392 = vpop.f32.mrb[0].mxu0
      %v393 = vadd.f32 %v288, %v392
      %v394 = vpop.f32.mrb[0].mxu0
      %v395 = vpop.f32.mrb[0].mxu0
      %v396 = vadd.f32 %v288, %v395
      %v397 = vpop.f32.mrb[0].mxu0
      %398 = vmatprep.mubr.bf16.mxu0 0
      %399 = vmatmul.mubr.bf16.gmra.mrb[0].mxu0 %v318
      %v400 = vpop.f32.mrb[0].mxu0
      %v401 = vadd.f32 %v288, %v400
      %v402 = vpop.f32.mrb[0].mxu0
      %v403 = vpop.f32.mrb[0].mxu0
      %v404 = vadd.f32 %v288, %v403
      %v405 = vpop.f32.mrb[0].mxu0
      %406 = vmatprep.mubr.bf16.mxu0 0
      %407 = vmatmul.mubr.bf16.gmra.mrb[0].mxu0 %v321
      %v408 = vpop.f32.mrb[0].mxu0
      %v409 = vadd.f32 %v288, %v408
      %v410 = vpop.f32.mrb[0].mxu0
      %v411 = vpop.f32.mrb[0].mxu0
      %v412 = vadd.f32 %v288, %v411
      %v413 = vpop.f32.mrb[0].mxu0
      %414 = vmatprep.mubr.bf16.mxu0 0
      %415 = vmatmul.mubr.bf16.gmra.mrb[0].mxu0 %v324
      %v416 = vpop.f32.mrb[0].mxu0
      %v417 = vadd.f32 %v288, %v416
      %v418 = vpop.f32.mrb[0].mxu0
      %v419 = vpop.f32.mrb[0].mxu0
      %v420 = vadd.f32 %v288, %v419
      %v421 = vpop.f32.mrb[0].mxu0
      %422 = vdwg.mxu0
      %v423 = vmax.f32 %v361, 0.0
      %v424 = vmax.f32 %v364, 0.0
      %v425 = vmax.f32 %v369, 0.0
      %v426 = vmax.f32 %v372, 0.0
      %v427 = vmax.f32 %v377, 0.0
      %v428 = vmax.f32 %v380, 0.0
      %v429 = vmax.f32 %v385, 0.0
      %v430 = vmax.f32 %v388, 0.0
      %v431 = vmax.f32 %v393, 0.0
      %v432 = vmax.f32 %v396, 0.0
      %v433 = vmax.f32 %v401, 0.0
      %v434 = vmax.f32 %v404, 0.0
      %v435 = vmax.f32 %v409, 0.0
      %v436 = vmax.f32 %v412, 0.0
      %v437 = vmax.f32 %v417, 0.0
      %v438 = vmax.f32 %v420, 0.0
      %v439 = vld [vmem:[%s2] sm:$0xf]
      %v440 = vld [vmem:[%s2 + $0x4] sm:$0xf]
      %v441 = vld [vmem:[%s2 + $0x8] sm:$0xf]
      %v442 = vld [vmem:[%s2 + $0xc] sm:$0xf]
      %v443 = vpack.c.bf16 %v424, %v423
      %v444 = vpack.c.bf16 %v426, %v425
      %v445 = vpack.c.bf16 %v428, %v427
      %v446 = vpack.c.bf16 %v430, %v429
      %v447 = vpack.c.bf16 %v432, %v431
      %v448 = vpack.c.bf16 %v434, %v433
      %v449 = vpack.c.bf16 %v436, %v435
      %v450 = vpack.c.bf16 %v438, %v437
      %v451 = vld [vmem:[%s3] sm:$0xf]
      %v452 = vld [vmem:[%s3 + $0x4] sm:$0xf]
      %v453 = vld [vmem:[%s3 + $0x8] sm:$0xf]
      %v454 = vld [vmem:[%s3 + $0xc] sm:$0xf]
      %v455 = vld [vmem:[%s3 + $0x10] sm:$0xf]
      %v456 = vld [vmem:[%s3 + $0x14] sm:$0xf]
      %v457 = vld [vmem:[%s3 + $0x18] sm:$0xf]
      %v458 = vld [vmem:[%s3 + $0x1c] sm:$0xf]
      %v467 = vunpack.c.l.b16 %v451
      %v468 = vunpack.c.l.b16 %v452
      %v469 = vunpack.c.l.b16 %v453
      %v470 = vunpack.c.l.b16 %v454
      %v471 = vunpack.c.l.b16 %v455
      %v472 = vunpack.c.l.b16 %v456
      %v473 = vunpack.c.l.b16 %v457
      %v474 = vunpack.c.l.b16 %v458
      %v475 = vpack.c.b16 %v468, %v467
      %v476 = vpack.c.b16 %v470, %v469
      %v477 = vpack.c.b16 %v472, %v471
      %v478 = vpack.c.b16 %v474, %v473
      %vm483 = vcmask 523264
      %v485 = vsel %vm483, %v443, 0
      %v488 = vsel %vm483, %v444, 0
      %v491 = vsel %vm483, %v445, 0
      %v494 = vsel %vm483, %v446, 0
      %v497 = vsel %vm483, %v447, 0
      %v500 = vsel %vm483, %v448, 0
      %v503 = vsel %vm483, %v449, 0
      %v506 = vsel %vm483, %v450, 0
      %508 = vmatprep.subr.bf16.mxu0 0
      %509 = vmatpush1.bf16.msra.mxu0 %v475
      %510 = vmatprep.subr.bf16.mxu0 0
      %511 = vmatpush1.bf16.msra.mxu0 %v476
      %512 = vmatprep.subr.bf16.mxu0 0
      %513 = vmatpush1.bf16.msra.mxu0 %v477
      %514 = vmatprep.subr.bf16.mxu0 0
      %515 = vmatpush1.bf16.msra.mxu0 %v478
      %516 = vmatprep.subr.bf16.mxu0 0
      %517 = vmatpush1.bf16.msra.mxu0 0
      %518 = vmatprep.subr.bf16.mxu0 0
      %519 = vmatpush1.bf16.msra.mxu0 0
      %520 = vmatprep.subr.bf16.mxu0 0
      %521 = vmatpush1.bf16.msra.mxu0 0
      %522 = vmatprep.subr.bf16.mxu0 0
      %523 = vmatpush1.bf16.msra.mxu0 0
      %524 = vmatprep.subr.bf16.mxu0 0
      %525 = vmatpush1.bf16.msra.mxu0 0
      %526 = vmatprep.subr.bf16.mxu0 0
      %527 = vmatpush1.bf16.msra.mxu0 0
      %528 = vmatprep.subr.bf16.mxu0 0
      %529 = vmatpush1.bf16.msra.mxu0 0
      %530 = vmatprep.subr.bf16.mxu0 0
      %531 = vmatpush1.bf16.msra.mxu0 0
      %532 = vmatprep.subr.bf16.mxu0 0
      %533 = vmatpush1.bf16.msra.mxu0 0
      %534 = vmatprep.subr.bf16.mxu0 0
      %535 = vmatpush1.bf16.msra.mxu0 0
      %536 = vmatprep.subr.bf16.mxu0 0
      %537 = vmatpush1.bf16.msra.mxu0 0
      %538 = vmatprep.subr.bf16.mxu0 0
      %539 = vmatpush1.bf16.msra.mxu0 0
      %540 = vmatprep.mubr.bf16.mxu0 0
      %541 = vmatmul.mubr.bf16.gmra.mrb[0].mxu0 %v485
      %v542 = vpop.f32.mrb[0].mxu0
      %v543 = vadd.f32 0.0, %v542
      %v544 = vpop.f32.mrb[0].mxu0
      %v545 = vpop.f32.mrb[0].mxu0
      %v546 = vadd.f32 0.0, %v545
      %v547 = vpop.f32.mrb[0].mxu0
      %548 = vmatprep.mubr.bf16.mxu0 0
      %549 = vmatmul.mubr.bf16.gmra.mrb[0].mxu0 %v488
      %v550 = vpop.f32.mrb[0].mxu0
      %v551 = vadd.f32 0.0, %v550
      %v552 = vpop.f32.mrb[0].mxu0
      %v553 = vpop.f32.mrb[0].mxu0
      %v554 = vadd.f32 0.0, %v553
      %v555 = vpop.f32.mrb[0].mxu0
      %556 = vmatprep.mubr.bf16.mxu0 0
      %557 = vmatmul.mubr.bf16.gmra.mrb[0].mxu0 %v491
      %v558 = vpop.f32.mrb[0].mxu0
      %v559 = vadd.f32 0.0, %v558
      %v560 = vpop.f32.mrb[0].mxu0
      %v561 = vpop.f32.mrb[0].mxu0
      %v562 = vadd.f32 0.0, %v561
      %v563 = vpop.f32.mrb[0].mxu0
      %564 = vmatprep.mubr.bf16.mxu0 0
      %565 = vmatmul.mubr.bf16.gmra.mrb[0].mxu0 %v494
      %v566 = vpop.f32.mrb[0].mxu0
      %v567 = vadd.f32 0.0, %v566
      %v568 = vpop.f32.mrb[0].mxu0
      %v569 = vpop.f32.mrb[0].mxu0
      %v570 = vadd.f32 0.0, %v569
      %v571 = vpop.f32.mrb[0].mxu0
      %572 = vmatprep.mubr.bf16.mxu0 0
      %573 = vmatmul.mubr.bf16.gmra.mrb[0].mxu0 %v497
      %v574 = vpop.f32.mrb[0].mxu0
      %v575 = vadd.f32 0.0, %v574
      %v576 = vpop.f32.mrb[0].mxu0
      %v577 = vpop.f32.mrb[0].mxu0
      %v578 = vadd.f32 0.0, %v577
      %v579 = vpop.f32.mrb[0].mxu0
      %580 = vmatprep.mubr.bf16.mxu0 0
      %581 = vmatmul.mubr.bf16.gmra.mrb[0].mxu0 %v500
      %v582 = vpop.f32.mrb[0].mxu0
      %v583 = vadd.f32 0.0, %v582
      %v584 = vpop.f32.mrb[0].mxu0
      %v585 = vpop.f32.mrb[0].mxu0
      %v586 = vadd.f32 0.0, %v585
      %v587 = vpop.f32.mrb[0].mxu0
      %588 = vmatprep.mubr.bf16.mxu0 0
      %589 = vmatmul.mubr.bf16.gmra.mrb[0].mxu0 %v503
      %v590 = vpop.f32.mrb[0].mxu0
      %v591 = vadd.f32 0.0, %v590
      %v592 = vpop.f32.mrb[0].mxu0
      %v593 = vpop.f32.mrb[0].mxu0
      %v594 = vadd.f32 0.0, %v593
      %v595 = vpop.f32.mrb[0].mxu0
      %596 = vmatprep.mubr.bf16.mxu0 0
      %597 = vmatmul.mubr.bf16.gmra.mrb[0].mxu0 %v506
      %v598 = vpop.f32.mrb[0].mxu0
      %v599 = vadd.f32 0.0, %v598
      %v600 = vpop.f32.mrb[0].mxu0
      %v601 = vpop.f32.mrb[0].mxu0
      %v602 = vadd.f32 0.0, %v601
      %v603 = vpop.f32.mrb[0].mxu0
      %604 = vdwg.mxu0
      %v609 = vunpack.c.l.b16 %v439
      %v610 = vunpack.c.l.b16 %v440
      %v611 = vunpack.c.l.b16 %v441
      %v612 = vunpack.c.l.b16 %v442
      %v613 = vpack.c.b16 %v610, %v609
      %v614 = vpack.c.b16 %v612, %v611
      %617 = vmatprep.subr.bf16.mxu0 0
      %618 = vmatpush1.bf16.msra.mxu0 %v613
      %619 = vmatprep.subr.bf16.mxu0 0
      %620 = vmatpush1.bf16.msra.mxu0 %v614
      %621 = vmatprep.subr.bf16.mxu0 0
      %622 = vmatpush1.bf16.msra.mxu0 0
      %623 = vmatprep.subr.bf16.mxu0 0
      %624 = vmatpush1.bf16.msra.mxu0 0
      %625 = vmatprep.subr.bf16.mxu0 0
      %626 = vmatpush1.bf16.msra.mxu0 0
      %627 = vmatprep.subr.bf16.mxu0 0
      %628 = vmatpush1.bf16.msra.mxu0 0
      %629 = vmatprep.subr.bf16.mxu0 0
      %630 = vmatpush1.bf16.msra.mxu0 0
      %631 = vmatprep.subr.bf16.mxu0 0
      %632 = vmatpush1.bf16.msra.mxu0 0
      %633 = vmatprep.subr.bf16.mxu0 0
      %634 = vmatpush1.bf16.msra.mxu0 0
      %635 = vmatprep.subr.bf16.mxu0 0
      %636 = vmatpush1.bf16.msra.mxu0 0
      %637 = vmatprep.subr.bf16.mxu0 0
      %638 = vmatpush1.bf16.msra.mxu0 0
      %639 = vmatprep.subr.bf16.mxu0 0
      %640 = vmatpush1.bf16.msra.mxu0 0
      %641 = vmatprep.subr.bf16.mxu0 0
      %642 = vmatpush1.bf16.msra.mxu0 0
      %643 = vmatprep.subr.bf16.mxu0 0
      %644 = vmatpush1.bf16.msra.mxu0 0
      %645 = vmatprep.subr.bf16.mxu0 0
      %646 = vmatpush1.bf16.msra.mxu0 0
      %647 = vmatprep.subr.bf16.mxu0 0
      %648 = vmatpush1.bf16.msra.mxu0 0
      %649 = vmatprep.mubr.bf16.mxu0 0
      %650 = vmatmul.mubr.bf16.gmra.mrb[0].mxu0 %v303
      %v651 = vpop.f32.mrb[0].mxu0
      %v652 = vadd.f32 %v543, %v651
      %v653 = vpop.f32.mrb[0].mxu0
      %v654 = vpop.f32.mrb[0].mxu0
      %v655 = vadd.f32 %v546, %v654
      %v656 = vpop.f32.mrb[0].mxu0
      %657 = vmatprep.mubr.bf16.mxu0 0
      %658 = vmatmul.mubr.bf16.gmra.mrb[0].mxu0 %v306
      %v659 = vpop.f32.mrb[0].mxu0
      %v660 = vadd.f32 %v551, %v659
      %v661 = vpop.f32.mrb[0].mxu0
      %v662 = vpop.f32.mrb[0].mxu0
      %v663 = vadd.f32 %v554, %v662
      %v664 = vpop.f32.mrb[0].mxu0
      %665 = vmatprep.mubr.bf16.mxu0 0
      %666 = vmatmul.mubr.bf16.gmra.mrb[0].mxu0 %v309
      %v667 = vpop.f32.mrb[0].mxu0
      %v668 = vadd.f32 %v559, %v667
      %v669 = vpop.f32.mrb[0].mxu0
      %v670 = vpop.f32.mrb[0].mxu0
      %v671 = vadd.f32 %v562, %v670
      %v672 = vpop.f32.mrb[0].mxu0
      %673 = vmatprep.mubr.bf16.mxu0 0
      %674 = vmatmul.mubr.bf16.gmra.mrb[0].mxu0 %v312
      %v675 = vpop.f32.mrb[0].mxu0
      %v676 = vadd.f32 %v567, %v675
      %v677 = vpop.f32.mrb[0].mxu0
      %v678 = vpop.f32.mrb[0].mxu0
      %v679 = vadd.f32 %v570, %v678
      %v680 = vpop.f32.mrb[0].mxu0
      %681 = vmatprep.mubr.bf16.mxu0 0
      %682 = vmatmul.mubr.bf16.gmra.mrb[0].mxu0 %v315
      %v683 = vpop.f32.mrb[0].mxu0
      %v684 = vadd.f32 %v575, %v683
      %v685 = vpop.f32.mrb[0].mxu0
      %v686 = vpop.f32.mrb[0].mxu0
      %v687 = vadd.f32 %v578, %v686
      %v688 = vpop.f32.mrb[0].mxu0
      %689 = vmatprep.mubr.bf16.mxu0 0
      %690 = vmatmul.mubr.bf16.gmra.mrb[0].mxu0 %v318
      %v691 = vpop.f32.mrb[0].mxu0
      %v692 = vadd.f32 %v583, %v691
      %v693 = vpop.f32.mrb[0].mxu0
      %v694 = vpop.f32.mrb[0].mxu0
      %v695 = vadd.f32 %v586, %v694
      %v696 = vpop.f32.mrb[0].mxu0
      %697 = vmatprep.mubr.bf16.mxu0 0
      %698 = vmatmul.mubr.bf16.gmra.mrb[0].mxu0 %v321
      %v699 = vpop.f32.mrb[0].mxu0
      %v700 = vadd.f32 %v591, %v699
      %v701 = vpop.f32.mrb[0].mxu0
      %v702 = vpop.f32.mrb[0].mxu0
      %v703 = vadd.f32 %v594, %v702
      %v704 = vpop.f32.mrb[0].mxu0
      %705 = vmatprep.mubr.bf16.mxu0 0
      %706 = vmatmul.mubr.bf16.gmra.mrb[0].mxu0 %v324
      %v707 = vpop.f32.mrb[0].mxu0
      %v708 = vadd.f32 %v599, %v707
      %v709 = vpop.f32.mrb[0].mxu0
      %v710 = vpop.f32.mrb[0].mxu0
      %v711 = vadd.f32 %v602, %v710
      %v712 = vpop.f32.mrb[0].mxu0
      %713 = vdwg.mxu0
      %v714 = vld [vmem:[%s5 + $0x1] sm:$0x1]
      %v715 = vlaneseq
      %v716 = vshrl.u32 %v715, 7
      %v717 = vsub.s32 0, %v716
      %v718 = vrot.slane %v714, %v717
      %v719 = vadd.f32 %v652, %v718
      %v720 = vadd.f32 %v655, %v718
      %v721 = vadd.f32 %v660, %v718
      %v722 = vadd.f32 %v663, %v718
      %v723 = vadd.f32 %v668, %v718
      %v724 = vadd.f32 %v671, %v718
      %v725 = vadd.f32 %v676, %v718
      %v726 = vadd.f32 %v679, %v718
      %v727 = vadd.f32 %v684, %v718
      %v728 = vadd.f32 %v687, %v718
      %v729 = vadd.f32 %v692, %v718
      %v730 = vadd.f32 %v695, %v718
      %v731 = vadd.f32 %v700, %v718
      %v732 = vadd.f32 %v703, %v718
      %v733 = vadd.f32 %v708, %v718
      %v734 = vadd.f32 %v711, %v718
      %v735 = vmax.f32 %v719, 0.0
      %v736 = vmax.f32 %v720, 0.0
      %v737 = vmax.f32 %v721, 0.0
      %v738 = vmax.f32 %v722, 0.0
      %v739 = vmax.f32 %v723, 0.0
      %v740 = vmax.f32 %v724, 0.0
      %v741 = vmax.f32 %v725, 0.0
      %v742 = vmax.f32 %v726, 0.0
      %v743 = vmax.f32 %v727, 0.0
      %v744 = vmax.f32 %v728, 0.0
      %v745 = vmax.f32 %v729, 0.0
      %v746 = vmax.f32 %v730, 0.0
      %v747 = vmax.f32 %v731, 0.0
      %v748 = vmax.f32 %v732, 0.0
      %v749 = vmax.f32 %v733, 0.0
      %v750 = vmax.f32 %v734, 0.0
      %v751 = vpack.c.bf16 %v736, %v735
      %v752 = vpack.c.bf16 %v738, %v737
      %v753 = vpack.c.bf16 %v740, %v739
      %v754 = vpack.c.bf16 %v742, %v741
      %v755 = vpack.c.bf16 %v744, %v743
      %v756 = vpack.c.bf16 %v746, %v745
      %v757 = vpack.c.bf16 %v748, %v747
      %v758 = vpack.c.bf16 %v750, %v749
      %v759 = vld [vmem:[%s4] sm:$0xf]
      %v760 = vld [vmem:[%s4 + $0x4] sm:$0xf]
      %v761 = vld [vmem:[%s4 + $0x8] sm:$0xf]
      %v762 = vld [vmem:[%s4 + $0xc] sm:$0xf]
      %v763 = vld [vmem:[%s5 + $0x2] sm:$0x1]
      %v764 = vlaneseq
      %v765 = vshrl.u32 %v764, 7
      %v766 = vsub.s32 0, %v765
      %v767 = vrot.slane %v763, %v766
      %v772 = vunpack.c.l.b16 %v759
      %v773 = vunpack.c.l.b16 %v760
      %v774 = vunpack.c.l.b16 %v761
      %v775 = vunpack.c.l.b16 %v762
      %v776 = vpack.c.b16 %v773, %v772
      %v777 = vpack.c.b16 %v775, %v774
      %v781 = vsel %vm301, %v751, 0
      %v784 = vsel %vm301, %v752, 0
      %v787 = vsel %vm301, %v753, 0
      %v790 = vsel %vm301, %v754, 0
      %v793 = vsel %vm301, %v755, 0
      %v796 = vsel %vm301, %v756, 0
      %v799 = vsel %vm301, %v757, 0
      %v802 = vsel %vm301, %v758, 0
      %804 = vmatprep.subr.bf16.mxu0 0
      %805 = vmatpush1.bf16.msra.mxu0 %v776
      %806 = vmatprep.subr.bf16.mxu0 0
      %807 = vmatpush1.bf16.msra.mxu0 %v777
      %808 = vmatprep.subr.bf16.mxu0 0
      %809 = vmatpush1.bf16.msra.mxu0 0
      %810 = vmatprep.subr.bf16.mxu0 0
      %811 = vmatpush1.bf16.msra.mxu0 0
      %812 = vmatprep.subr.bf16.mxu0 0
      %813 = vmatpush1.bf16.msra.mxu0 0
      %814 = vmatprep.subr.bf16.mxu0 0
      %815 = vmatpush1.bf16.msra.mxu0 0
      %816 = vmatprep.subr.bf16.mxu0 0
      %817 = vmatpush1.bf16.msra.mxu0 0
      %818 = vmatprep.subr.bf16.mxu0 0
      %819 = vmatpush1.bf16.msra.mxu0 0
      %820 = vmatprep.subr.bf16.mxu0 0
      %821 = vmatpush1.bf16.msra.mxu0 0
      %822 = vmatprep.subr.bf16.mxu0 0
      %823 = vmatpush1.bf16.msra.mxu0 0
      %824 = vmatprep.subr.bf16.mxu0 0
      %825 = vmatpush1.bf16.msra.mxu0 0
      %826 = vmatprep.subr.bf16.mxu0 0
      %827 = vmatpush1.bf16.msra.mxu0 0
      %828 = vmatprep.subr.bf16.mxu0 0
      %829 = vmatpush1.bf16.msra.mxu0 0
      %830 = vmatprep.subr.bf16.mxu0 0
      %831 = vmatpush1.bf16.msra.mxu0 0
      %832 = vmatprep.subr.bf16.mxu0 0
      %833 = vmatpush1.bf16.msra.mxu0 0
      %834 = vmatprep.subr.bf16.mxu0 0
      %835 = vmatpush1.bf16.msra.mxu0 0
      %836 = vmatprep.mubr.bf16.mxu0 0
      %837 = vmatmul.mubr.bf16.gmra.mrb[0].mxu0 %v781
      %v838 = vpop.f32.mrb[0].mxu0
      %v839 = vadd.f32 %v767, %v838
      %v840 = vpop.f32.mrb[0].mxu0
      %v841 = vpop.f32.mrb[0].mxu0
      %v842 = vadd.f32 %v767, %v841
      %v843 = vpop.f32.mrb[0].mxu0
      %844 = vmatprep.mubr.bf16.mxu0 0
      %845 = vmatmul.mubr.bf16.gmra.mrb[0].mxu0 %v784
      %v846 = vpop.f32.mrb[0].mxu0
      %v847 = vadd.f32 %v767, %v846
      %v848 = vpop.f32.mrb[0].mxu0
      %v849 = vpop.f32.mrb[0].mxu0
      %v850 = vadd.f32 %v767, %v849
      %v851 = vpop.f32.mrb[0].mxu0
      %852 = vmatprep.mubr.bf16.mxu0 0
      %853 = vmatmul.mubr.bf16.gmra.mrb[0].mxu0 %v787
      %v854 = vpop.f32.mrb[0].mxu0
      %v855 = vadd.f32 %v767, %v854
      %v856 = vpop.f32.mrb[0].mxu0
      %v857 = vpop.f32.mrb[0].mxu0
      %v858 = vadd.f32 %v767, %v857
      %v859 = vpop.f32.mrb[0].mxu0
      %860 = vmatprep.mubr.bf16.mxu0 0
      %861 = vmatmul.mubr.bf16.gmra.mrb[0].mxu0 %v790
      %v862 = vpop.f32.mrb[0].mxu0
      %v863 = vadd.f32 %v767, %v862
      %v864 = vpop.f32.mrb[0].mxu0
      %v865 = vpop.f32.mrb[0].mxu0
      %v866 = vadd.f32 %v767, %v865
      %v867 = vpop.f32.mrb[0].mxu0
      %868 = vmatprep.mubr.bf16.mxu0 0
      %869 = vmatmul.mubr.bf16.gmra.mrb[0].mxu0 %v793
      %v870 = vpop.f32.mrb[0].mxu0
      %v871 = vadd.f32 %v767, %v870
      %v872 = vpop.f32.mrb[0].mxu0
      %v873 = vpop.f32.mrb[0].mxu0
      %v874 = vadd.f32 %v767, %v873
      %v875 = vpop.f32.mrb[0].mxu0
      %876 = vmatprep.mubr.bf16.mxu0 0
      %877 = vmatmul.mubr.bf16.gmra.mrb[0].mxu0 %v796
      %v878 = vpop.f32.mrb[0].mxu0
      %v879 = vadd.f32 %v767, %v878
      %v880 = vpop.f32.mrb[0].mxu0
      %v881 = vpop.f32.mrb[0].mxu0
      %v882 = vadd.f32 %v767, %v881
      %v883 = vpop.f32.mrb[0].mxu0
      %884 = vmatprep.mubr.bf16.mxu0 0
      %885 = vmatmul.mubr.bf16.gmra.mrb[0].mxu0 %v799
      %v886 = vpop.f32.mrb[0].mxu0
      %v887 = vadd.f32 %v767, %v886
      %v888 = vpop.f32.mrb[0].mxu0
      %v889 = vpop.f32.mrb[0].mxu0
      %v890 = vadd.f32 %v767, %v889
      %v891 = vpop.f32.mrb[0].mxu0
      %892 = vmatprep.mubr.bf16.mxu0 0
      %893 = vmatmul.mubr.bf16.gmra.mrb[0].mxu0 %v802
      %v894 = vpop.f32.mrb[0].mxu0
      %v895 = vadd.f32 %v767, %v894
      %v896 = vpop.f32.mrb[0].mxu0
      %v897 = vpop.f32.mrb[0].mxu0
      %v898 = vadd.f32 %v767, %v897
      %v899 = vpop.f32.mrb[0].mxu0
      %900 = vdwg.mxu0
      %v901 = vmax.f32 %v839, 0.0
      %v902 = vmax.f32 %v842, 0.0
      %v903 = vmax.f32 %v847, 0.0
      %v904 = vmax.f32 %v850, 0.0
      %v905 = vmax.f32 %v855, 0.0
      %v906 = vmax.f32 %v858, 0.0
      %v907 = vmax.f32 %v863, 0.0
      %v908 = vmax.f32 %v866, 0.0
      %v909 = vmax.f32 %v871, 0.0
      %v910 = vmax.f32 %v874, 0.0
      %v911 = vmax.f32 %v879, 0.0
      %v912 = vmax.f32 %v882, 0.0
      %v913 = vmax.f32 %v887, 0.0
      %v914 = vmax.f32 %v890, 0.0
      %v915 = vmax.f32 %v895, 0.0
      %v916 = vmax.f32 %v898, 0.0
      %v917 = vld [vmem:[%s5 + $0x3] sm:$0x1]
      %v918 = vlaneseq
      %v919 = vshrl.u32 %v918, 7
      %v920 = vsub.s32 0, %v919
      %v921 = vrot.slane %v917, %v920
      %v922 = vmul.f32 %v901, %v921
      %v923 = vmul.f32 %v902, %v921
      %v924 = vmul.f32 %v903, %v921
      %v925 = vmul.f32 %v904, %v921
      %v926 = vmul.f32 %v905, %v921
      %v927 = vmul.f32 %v906, %v921
      %v928 = vmul.f32 %v907, %v921
      %v929 = vmul.f32 %v908, %v921
      %v930 = vmul.f32 %v909, %v921
      %v931 = vmul.f32 %v910, %v921
      %v932 = vmul.f32 %v911, %v921
      %v933 = vmul.f32 %v912, %v921
      %v934 = vmul.f32 %v913, %v921
      %v935 = vmul.f32 %v914, %v921
      %v936 = vmul.f32 %v915, %v921
      %v937 = vmul.f32 %v916, %v921
      %v938 = vsel %vm301, %v922, 0.0
      %939 = vadd.xlane.f32.xlu0 %v938
      %v940 = vpop.xlane.xlu0 %939
      %v941 = vsel %vm301, %v923, 0.0
      %942 = vadd.xlane.f32.xlu0 %v941
      %v943 = vpop.xlane.xlu0 %942
      %v944 = vsel %vm301, %v924, 0.0
      %945 = vadd.xlane.f32.xlu0 %v944
      %v946 = vpop.xlane.xlu0 %945
      %v947 = vsel %vm301, %v925, 0.0
      %948 = vadd.xlane.f32.xlu0 %v947
      %v949 = vpop.xlane.xlu0 %948
      %v950 = vsel %vm301, %v926, 0.0
      %951 = vadd.xlane.f32.xlu0 %v950
      %v952 = vpop.xlane.xlu0 %951
      %v953 = vsel %vm301, %v927, 0.0
      %954 = vadd.xlane.f32.xlu0 %v953
      %v955 = vpop.xlane.xlu0 %954
      %v956 = vsel %vm301, %v928, 0.0
      %957 = vadd.xlane.f32.xlu0 %v956
      %v958 = vpop.xlane.xlu0 %957
      %v959 = vsel %vm301, %v929, 0.0
      %960 = vadd.xlane.f32.xlu0 %v959
      %v961 = vpop.xlane.xlu0 %960
      %v962 = vsel %vm301, %v930, 0.0
      %963 = vadd.xlane.f32.xlu0 %v962
      %v964 = vpop.xlane.xlu0 %963
      %v965 = vsel %vm301, %v931, 0.0
      %966 = vadd.xlane.f32.xlu0 %v965
      %v967 = vpop.xlane.xlu0 %966
      %v968 = vsel %vm301, %v932, 0.0
      %969 = vadd.xlane.f32.xlu0 %v968
      %v970 = vpop.xlane.xlu0 %969
      %v971 = vsel %vm301, %v933, 0.0
      %972 = vadd.xlane.f32.xlu0 %v971
      %v973 = vpop.xlane.xlu0 %972
      %v974 = vsel %vm301, %v934, 0.0
      %975 = vadd.xlane.f32.xlu0 %v974
      %v976 = vpop.xlane.xlu0 %975
      %v977 = vsel %vm301, %v935, 0.0
      %978 = vadd.xlane.f32.xlu0 %v977
      %v979 = vpop.xlane.xlu0 %978
      %v980 = vsel %vm301, %v936, 0.0
      %981 = vadd.xlane.f32.xlu0 %v980
      %v982 = vpop.xlane.xlu0 %981
      %v983 = vsel %vm301, %v937, 0.0
      %984 = vadd.xlane.f32.xlu0 %v983
      %v985 = vpop.xlane.xlu0 %984
      %v986 = vld [vmem:[%s5 + $0x4] sm:$0x1]
      %v987 = vlaneseq
      %v988 = vshrl.u32 %v987, 7
      %v989 = vsub.s32 0, %v988
      %v990 = vrot.slane %v986, %v989
      %v991 = vadd.f32 %v940, %v990
      %v992 = vadd.f32 %v943, %v990
      %v993 = vadd.f32 %v946, %v990
      %v994 = vadd.f32 %v949, %v990
      %v995 = vadd.f32 %v952, %v990
      %v996 = vadd.f32 %v955, %v990
      %v997 = vadd.f32 %v958, %v990
      %v998 = vadd.f32 %v961, %v990
      %v999 = vadd.f32 %v964, %v990
      %v1000 = vadd.f32 %v967, %v990
      %v1001 = vadd.f32 %v970, %v990
      %v1002 = vadd.f32 %v973, %v990
      %v1003 = vadd.f32 %v976, %v990
      %v1004 = vadd.f32 %v979, %v990
      %v1005 = vadd.f32 %v982, %v990
      %v1006 = vadd.f32 %v985, %v990
      %v1007 = vsub.f32 0.0, %v991
      %v1008 = vsub.f32 0.0, %v992
      %v1009 = vsub.f32 0.0, %v993
      %v1010 = vsub.f32 0.0, %v994
      %v1011 = vsub.f32 0.0, %v995
      %v1012 = vsub.f32 0.0, %v996
      %v1013 = vsub.f32 0.0, %v997
      %v1014 = vsub.f32 0.0, %v998
      %v1015 = vsub.f32 0.0, %v999
      %v1016 = vsub.f32 0.0, %v1000
      %v1017 = vsub.f32 0.0, %v1001
      %v1018 = vsub.f32 0.0, %v1002
      %v1019 = vsub.f32 0.0, %v1003
      %v1020 = vsub.f32 0.0, %v1004
      %v1021 = vsub.f32 0.0, %v1005
      %v1022 = vsub.f32 0.0, %v1006
      %v1023 = vmul.f32 %v1007, 1.442695
      %v1024 = vpow.pop %v1023
      %v1025 = vmul.f32 %v1008, 1.442695
      %v1026 = vpow.pop %v1025
      %v1027 = vmul.f32 %v1009, 1.442695
      %v1028 = vpow.pop %v1027
      %v1029 = vmul.f32 %v1010, 1.442695
      %v1030 = vpow.pop %v1029
      %v1031 = vmul.f32 %v1011, 1.442695
      %v1032 = vpow.pop %v1031
      %v1033 = vmul.f32 %v1012, 1.442695
      %v1034 = vpow.pop %v1033
      %v1035 = vmul.f32 %v1013, 1.442695
      %v1036 = vpow.pop %v1035
      %v1037 = vmul.f32 %v1014, 1.442695
      %v1038 = vpow.pop %v1037
      %v1039 = vmul.f32 %v1015, 1.442695
      %v1040 = vpow.pop %v1039
      %v1041 = vmul.f32 %v1016, 1.442695
      %v1042 = vpow.pop %v1041
      %v1043 = vmul.f32 %v1017, 1.442695
      %v1044 = vpow.pop %v1043
      %v1045 = vmul.f32 %v1018, 1.442695
      %v1046 = vpow.pop %v1045
      %v1047 = vmul.f32 %v1019, 1.442695
      %v1048 = vpow.pop %v1047
      %v1049 = vmul.f32 %v1020, 1.442695
      %v1050 = vpow.pop %v1049
      %v1051 = vmul.f32 %v1021, 1.442695
      %v1052 = vpow.pop %v1051
      %v1053 = vmul.f32 %v1022, 1.442695
      %v1054 = vpow.pop %v1053
      %v1055 = vadd.f32 %v1024, 1.0
      %v1056 = vadd.f32 %v1026, 1.0
      %v1057 = vadd.f32 %v1028, 1.0
      %v1058 = vadd.f32 %v1030, 1.0
      %v1059 = vadd.f32 %v1032, 1.0
      %v1060 = vadd.f32 %v1034, 1.0
      %v1061 = vadd.f32 %v1036, 1.0
      %v1062 = vadd.f32 %v1038, 1.0
      %v1063 = vadd.f32 %v1040, 1.0
      %v1064 = vadd.f32 %v1042, 1.0
      %v1065 = vadd.f32 %v1044, 1.0
      %v1066 = vadd.f32 %v1046, 1.0
      %v1067 = vadd.f32 %v1048, 1.0
      %v1068 = vadd.f32 %v1050, 1.0
      %v1069 = vadd.f32 %v1052, 1.0
      %v1070 = vadd.f32 %v1054, 1.0
      %v1071 = vrcp.pop %v1055
      %v1072 = vrcp.pop %v1056
      %v1073 = vrcp.pop %v1057
      %v1074 = vrcp.pop %v1058
      %v1075 = vrcp.pop %v1059
      %v1076 = vrcp.pop %v1060
      %v1077 = vrcp.pop %v1061
      %v1078 = vrcp.pop %v1062
      %v1079 = vrcp.pop %v1063
      %v1080 = vrcp.pop %v1064
      %v1081 = vrcp.pop %v1065
      %v1082 = vrcp.pop %v1066
      %v1083 = vrcp.pop %v1067
      %v1084 = vrcp.pop %v1068
      %v1085 = vrcp.pop %v1069
      %v1086 = vrcp.pop %v1070
      %vm1087 = vcmask 7168
      %1088 = vst.msk [vmem:[%s253] sm:$0xff] %vm1087, %v1071
      %1089 = vst.msk [vmem:[%s253 + $0x8] sm:$0xff] %vm1087, %v1072
      %1090 = vst.msk [vmem:[%s253 + $0x10] sm:$0xff] %vm1087, %v1073
      %1091 = vst.msk [vmem:[%s253 + $0x18] sm:$0xff] %vm1087, %v1074
      %1092 = vst.msk [vmem:[%s253 + $0x20] sm:$0xff] %vm1087, %v1075
      %1093 = vst.msk [vmem:[%s253 + $0x28] sm:$0xff] %vm1087, %v1076
      %1094 = vst.msk [vmem:[%s253 + $0x30] sm:$0xff] %vm1087, %v1077
      %1095 = vst.msk [vmem:[%s253 + $0x38] sm:$0xff] %vm1087, %v1078
      %1096 = vst.msk [vmem:[%s253 + $0x40] sm:$0xff] %vm1087, %v1079
      %1097 = vst.msk [vmem:[%s253 + $0x48] sm:$0xff] %vm1087, %v1080
      %1098 = vst.msk [vmem:[%s253 + $0x50] sm:$0xff] %vm1087, %v1081
      %1099 = vst.msk [vmem:[%s253 + $0x58] sm:$0xff] %vm1087, %v1082
      %1100 = vst.msk [vmem:[%s253 + $0x60] sm:$0xff] %vm1087, %v1083
      %1101 = vst.msk [vmem:[%s253 + $0x68] sm:$0xff] %vm1087, %v1084
      %1102 = vst.msk [vmem:[%s253 + $0x70] sm:$0xff] %vm1087, %v1085
      %1103 = vst.msk [vmem:[%s253 + $0x78] sm:$0xff] %vm1087, %v1086
      %s1104 = smul.u32 16, %s17
      %p1105 = scmp.lt.s32.totalorder %s1104, 31
      %s1106 = scalar_select %p1105, %s1104, 31
      %s1107 = smul.addr %s1106, 8
      %s1108 = scalar_lea.vmem %s6, %s1107
      // Predicated region
      $region45: #{tpu_custom_call.1} parent=43 // pred_check
        %p1109 = pneg %p166
      $region46: #{tpu_custom_call.1} parent=43 // pred_check_branch
        %1111 = sbr.rel (%p1109) target = $region48
      $region47: #{tpu_custom_call.1} parent=43 // pred_region
        %s1112 = smul.u32 16, %s17
      $region48: #{tpu_custom_call.1} parent=43 // pred_fallthru
        _
    $region44: #{tpu_custom_call.1} parent=5 // pred_fallthru
      _
    %p1113 = scmp.le.s32.totalorder 2, %s12
    // Predicated region
    $region49: #{tpu_custom_call.1} parent=5 // pred_check
      %p1114 = pneg %p1113
    $region50: #{tpu_custom_call.1} parent=5 // pred_check_branch
      %1116 = sbr.rel (%p1114) target = $region52
    $region51: #{tpu_custom_call.1} parent=5 // pred_region
      %s1117 = ssub.s32 %s12, 2
      // Predicated region
      $region53: #{tpu_custom_call.1} parent=51 // pred_check
        %p1118 = pneg %p172
      $region54: #{tpu_custom_call.1} parent=51 // pred_check_branch
        %1120 = sbr.rel (%p1118) target = $region56
      $region55: #{tpu_custom_call.1} parent=51 // pred_region
        %s1121 = smul.u32 16, %s18
        %p1122 = scmp.lt.s32.totalorder %s1121, 31
        %s1123 = scalar_select %p1122, %s1121, 31
        %s1124 = smul.addr %s1123, 8
        %s1125 = scalar_lea.vmem %s6, %s1124
      $region56: #{tpu_custom_call.1} parent=51 // pred_fallthru
        _
    $region52: #{tpu_custom_call.1} parent=5 // pred_fallthru
      _
  $region6: #{tpu_custom_call.1} parent=0 // loop_footer
    %s16 = sadd.s32 1, %s12
  $region7: #{tpu_custom_call.1} parent=0 // loop_footer_branch
    %11 = sbr.rel target = $region3
  $region8: #{tpu_custom_call.1} parent=0 // loop_exit
    _

</llo_original>
